<compile_context>
chip_gen: v5e
topology: v5e:2x2
jax: 0.10.0
libtpu: 0.0.40
codegen_flags: <defaults>
</compile_context>

<pallas_src>
import functools
import math

import jax
import jax.numpy as jnp
from jax import lax
from jax.experimental import pallas as pl
from jax.experimental.pallas import tpu as pltpu

EPSILON = 1e-07
PAD_IDX = 0

_STREAM = jnp.bfloat16     # storage dtype for hoisted gates / streamed states
_UNROLL = 8                # inner unroll of the in-kernel time loop


# ----------------------------------------------------------------------------
# Small helpers.
# ----------------------------------------------------------------------------
def _nb(shape, dtype):
    return math.prod(shape) * jnp.dtype(dtype).itemsize


def _mosaic(dims, need_bytes):
    # Explicit scoped-VMEM budget: ~2x for double buffering + slack, clamped so
    # the request is legal on every generation (v7x physical VMEM is 64 MiB).
    limit = int(max(16 << 20, min(2 * need_bytes + (4 << 20), 64 << 20)))
    return pltpu.CompilerParams(dimension_semantics=dims,
                                vmem_limit_bytes=limit)


def _row_tile(rows, target=512):
    if rows <= target:
        return rows                       # full extent is always a legal block
    return max(8, (target // 8) * 8)      # sublane-aligned tile, cdiv grid


def _col_tile(cols, target=512):
    if cols <= target:
        return cols
    return max(128, (target // 128) * 128)


def _time_tile(T, target=64):
    """Time-chunk size (multiple of 8 -> clean inner unroll) + padded length."""
    tblk = min(target, -(-T // 8) * 8)
    Tp = -(-T // tblk) * tblk
    return tblk, Tp


# ----------------------------------------------------------------------------
# Row-tiled dense kernels (time-parallel matmuls hoisted out of recurrences).
# ----------------------------------------------------------------------------
def _dense_kernel(x_ref, w_ref, b_ref, o_ref, *, out_dtype):
    y = (jnp.dot(x_ref[...].astype(jnp.float32), w_ref[...],
                 preferred_element_type=jnp.float32) + b_ref[...])
    o_ref[...] = y.astype(out_dtype)


def dense(x, w, b, out_dtype=jnp.float32):
    R, K = x.shape
    N = w.shape[1]
    tm = _row_tile(R)
    nr = pl.cdiv(R, tm)
    need = _nb((tm, K), x.dtype) + _nb((K, N), w.dtype) + _nb((tm, N), out_dtype)
    # TODO(synk): constant-index weight specs could use pipeline_mode=pl.Buffered(1)
    # to drop the redundant second weight buffer once that path is validated.
    return pl.pallas_call(
        functools.partial(_dense_kernel, out_dtype=out_dtype),
        out_shape=jax.ShapeDtypeStruct((R, N), out_dtype),
        grid_spec=pltpu.PrefetchScalarGridSpec(
            num_scalar_prefetch=0, grid=(nr,),
            in_specs=[pl.BlockSpec((tm, K), lambda r: (r, 0)),
                      pl.BlockSpec((K, N), lambda r: (0, 0)),
                      pl.BlockSpec((1, N), lambda r: (0, 0))],
            out_specs=pl.BlockSpec((tm, N), lambda r: (r, 0))),
        compiler_params=_mosaic(("parallel",), need),
    )(x, w, b)


def _dense2_kernel(xa_ref, xb_ref, w_ref, b_ref, o_ref, *, ka, out_dtype):
    # y = concat([xa, xb], -1) @ w + b   without materializing the concat.
    y = (jnp.dot(xa_ref[...].astype(jnp.float32), w_ref[:ka, :],
                 preferred_element_type=jnp.float32)
         + jnp.dot(xb_ref[...].astype(jnp.float32), w_ref[ka:, :],
                   preferred_element_type=jnp.float32)
         + b_ref[...])
    o_ref[...] = y.astype(out_dtype)


def dense2(xa, xb, w, b, out_dtype=jnp.float32):
    R, Ka = xa.shape
    Kb = xb.shape[1]
    N = w.shape[1]
    tm = _row_tile(R)
    nr = pl.cdiv(R, tm)
    need = (_nb((tm, Ka), xa.dtype) + _nb((tm, Kb), xb.dtype)
            + _nb((Ka + Kb, N), w.dtype) + _nb((tm, N), out_dtype))
    return pl.pallas_call(
        functools.partial(_dense2_kernel, ka=Ka, out_dtype=out_dtype),
        out_shape=jax.ShapeDtypeStruct((R, N), out_dtype),
        grid_spec=pltpu.PrefetchScalarGridSpec(
            num_scalar_prefetch=0, grid=(nr,),
            in_specs=[pl.BlockSpec((tm, Ka), lambda r: (r, 0)),
                      pl.BlockSpec((tm, Kb), lambda r: (r, 0)),
                      pl.BlockSpec((Ka + Kb, N), lambda r: (0, 0)),
                      pl.BlockSpec((1, N), lambda r: (0, 0))],
            out_specs=pl.BlockSpec((tm, N), lambda r: (r, 0))),
        compiler_params=_mosaic(("parallel",), need),
    )(xa, xb, w, b)


# Fused fwd+bwd input projections: the activations are read from HBM once and
# both direction's gate tensors are produced in a single kernel call.
def _dual_proj_kernel(x_ref, wf_ref, bf_ref, wb_ref, bb_ref, of_ref, ob_ref):
    x = x_ref[...].astype(jnp.float32)
    of_ref[...] = (jnp.dot(x, wf_ref[...], preferred_element_type=jnp.float32)
                   + bf_ref[...]).astype(_STREAM)
    ob_ref[...] = (jnp.dot(x, wb_ref[...], preferred_element_type=jnp.float32)
                   + bb_ref[...]).astype(_STREAM)


def dual_proj(x, wf, bf, wb, bb):
    R, K = x.shape
    N = wf.shape[1]
    tm = _row_tile(R)
    nr = pl.cdiv(R, tm)
    need = (_nb((tm, K), x.dtype) + 2 * _nb((K, N), wf.dtype)
            + 2 * _nb((tm, N), _STREAM))
    return pl.pallas_call(
        _dual_proj_kernel,
        out_shape=(jax.ShapeDtypeStruct((R, N), _STREAM),
                   jax.ShapeDtypeStruct((R, N), _STREAM)),
        grid_spec=pltpu.PrefetchScalarGridSpec(
            num_scalar_prefetch=0, grid=(nr,),
            in_specs=[pl.BlockSpec((tm, K), lambda r: (r, 0)),
                      pl.BlockSpec((K, N), lambda r: (0, 0)),
                      pl.BlockSpec((1, N), lambda r: (0, 0)),
                      pl.BlockSpec((K, N), lambda r: (0, 0)),
                      pl.BlockSpec((1, N), lambda r: (0, 0))],
            out_specs=[pl.BlockSpec((tm, N), lambda r: (r, 0)),
                       pl.BlockSpec((tm, N), lambda r: (r, 0))]),
        compiler_params=_mosaic(("parallel",), need),
    )(x, wf, bf, wb, bb)


def _dual_proj2_kernel(xa_ref, xb_ref, wf_ref, bf_ref, wb_ref, bb_ref,
                       of_ref, ob_ref, *, ka):
    xa = xa_ref[...].astype(jnp.float32)
    xb = xb_ref[...].astype(jnp.float32)
    of_ref[...] = (jnp.dot(xa, wf_ref[:ka, :], preferred_element_type=jnp.float32)
                   + jnp.dot(xb, wf_ref[ka:, :], preferred_element_type=jnp.float32)
                   + bf_ref[...]).astype(_STREAM)
    ob_ref[...] = (jnp.dot(xa, wb_ref[:ka, :], preferred_element_type=jnp.float32)
                   + jnp.dot(xb, wb_ref[ka:, :], preferred_element_type=jnp.float32)
                   + bb_ref[...]).astype(_STREAM)


def dual_proj2(xa, xb, wf, bf, wb, bb):
    R, Ka = xa.shape
    Kb = xb.shape[1]
    N = wf.shape[1]
    tm = _row_tile(R)
    nr = pl.cdiv(R, tm)
    need = (_nb((tm, Ka), xa.dtype) + _nb((tm, Kb), xb.dtype)
            + 2 * _nb((Ka + Kb, N), wf.dtype) + 2 * _nb((tm, N), _STREAM))
    return pl.pallas_call(
        functools.partial(_dual_proj2_kernel, ka=Ka),
        out_shape=(jax.ShapeDtypeStruct((R, N), _STREAM),
                   jax.ShapeDtypeStruct((R, N), _STREAM)),
        grid_spec=pltpu.PrefetchScalarGridSpec(
            num_scalar_prefetch=0, grid=(nr,),
            in_specs=[pl.BlockSpec((tm, Ka), lambda r: (r, 0)),
                      pl.BlockSpec((tm, Kb), lambda r: (r, 0)),
                      pl.BlockSpec((Ka + Kb, N), lambda r: (0, 0)),
                      pl.BlockSpec((1, N), lambda r: (0, 0)),
                      pl.BlockSpec((Ka + Kb, N), lambda r: (0, 0)),
                      pl.BlockSpec((1, N), lambda r: (0, 0))],
            out_specs=[pl.BlockSpec((tm, N), lambda r: (r, 0)),
                       pl.BlockSpec((tm, N), lambda r: (r, 0))]),
        compiler_params=_mosaic(("parallel",), need),
    )(xa, xb, wf, bf, wb, bb)


# ----------------------------------------------------------------------------
# Fused bidirectional LSTM layer, time-chunked.
#   grid=(T/T_BLK,); the forward direction streams blocks in natural order,
#   the backward direction's blocks come in REVERSED order via its index_map,
#   and within each block it is processed at local index T_BLK-1-t.
#   h/c live in persistent VMEM scratch (initialized at grid step 0).
# ----------------------------------------------------------------------------
def _bilstm_kernel(gxf_ref, gxb_ref, whf_ref, whb_ref, of_ref, ob_ref,
                   hf_sc, cf_sc, hb_sc, cb_sc, *, hid, unroll):
    H = hid
    tblk = gxf_ref.shape[0]

    @pl.when(pl.program_id(0) == 0)
    def _():
        hf_sc[...] = jnp.zeros_like(hf_sc)
        cf_sc[...] = jnp.zeros_like(cf_sc)
        hb_sc[...] = jnp.zeros_like(hb_sc)
        cb_sc[...] = jnp.zeros_like(cb_sc)

    def cell(gates, c_prev):
        i = jax.nn.sigmoid(gates[:, 0 * H:1 * H])
        f = jax.nn.sigmoid(gates[:, 1 * H:2 * H])
        g = jnp.tanh(gates[:, 2 * H:3 * H])
        o = jax.nn.sigmoid(gates[:, 3 * H:4 * H])
        c = f * c_prev + i * g
        return o * jnp.tanh(c), c

    @pl.loop(0, tblk // unroll)
    def _(tt):
        for u in range(unroll):
            t = tt * unroll + u

            # forward direction: local step t of this block
            gf = gxf_ref[t].astype(jnp.float32) + jnp.dot(
                hf_sc[...].astype(_STREAM), whf_ref[...],
                preferred_element_type=jnp.float32)
            h_f, c_f = cell(gf, cf_sc[...])
            hf_sc[...] = h_f
            cf_sc[...] = c_f
            of_ref[t] = h_f.astype(_STREAM)

            # backward direction: block order is reversed by its BlockSpec,
            # so within the block time runs from the end.
            tb = tblk - 1 - t
            gb = gxb_ref[tb].astype(jnp.float32) + jnp.dot(
                hb_sc[...].astype(_STREAM), whb_ref[...],
                preferred_element_type=jnp.float32)
            h_b, c_b = cell(gb, cb_sc[...])
            hb_sc[...] = h_b
            cb_sc[...] = c_b
            ob_ref[tb] = h_b.astype(_STREAM)


def bilstm(gxf, gxb, w_hh_f, w_hh_b):
    """gxf/gxb: (T, B, 4H) precomputed input gates -> (hs_fwd, hs_bwd) in bf16."""
    T, B, G = gxf.shape
    H = w_hh_f.shape[0]
    tblk, Tp = _time_tile(T)
    if Tp != T:
        # Zero gate pre-activations keep (h, c) == 0, so end-padding is neutral
        # for the reversed direction (which encounters the padded steps first).
        pad = ((0, Tp - T), (0, 0), (0, 0))
        gxf = jnp.pad(gxf, pad)
        gxb = jnp.pad(gxb, pad)
    nb = Tp // tblk
    whf = w_hh_f.astype(_STREAM)
    whb = w_hh_b.astype(_STREAM)

    need = (2 * _nb((tblk, B, G), _STREAM) + 2 * _nb((H, G), _STREAM)
            + 2 * _nb((tblk, B, H), _STREAM) + 4 * _nb((B, H), jnp.float32))
    # TODO(synk): on v7x the two directions could run on separate TensorCores
    # via pl.core_map / core_parallel; kept single-core for portability.
    hs_f, hs_b = pl.pallas_call(
        functools.partial(_bilstm_kernel, hid=H, unroll=_UNROLL),
        out_shape=(jax.ShapeDtypeStruct((Tp, B, H), _STREAM),
                   jax.ShapeDtypeStruct((Tp, B, H), _STREAM)),
        grid_spec=pltpu.PrefetchScalarGridSpec(
            num_scalar_prefetch=0, grid=(nb,),
            in_specs=[
                pl.BlockSpec((tblk, B, G), lambda i: (i, 0, 0)),
                pl.BlockSpec((tblk, B, G), lambda i, nb=nb: (nb - 1 - i, 0, 0)),
                pl.BlockSpec((H, G), lambda i: (0, 0)),
                pl.BlockSpec((H, G), lambda i: (0, 0)),
            ],
            out_specs=[
                pl.BlockSpec((tblk, B, H), lambda i: (i, 0, 0)),
                pl.BlockSpec((tblk, B, H), lambda i, nb=nb: (nb - 1 - i, 0, 0)),
            ],
            scratch_shapes=[pltpu.VMEM((B, H), jnp.float32)] * 4),
        compiler_params=_mosaic(("arbitrary",), need),
    )(gxf, gxb, whf, whb)
    if Tp != T:
        hs_f = hs_f[:T]
        hs_b = hs_b[:T]
    return hs_f, hs_b


# ----------------------------------------------------------------------------
# Decoder: stacked LSTM cells + masked attention + linear_out(tanh), with the
# decode-time axis chunked (streamed gx0/ctx blocks, persistent state scratch).
# The vocab projection + log_softmax run in separate V-tiled kernels.
# ----------------------------------------------------------------------------
def _make_decoder_kernel(n_layers, hid, unroll):
    H = hid

    def kernel(*refs):
        gx0_ref, whh0_ref = refs[0], refs[1]
        nrest = 3 * (n_layers - 1)
        layer_refs = refs[2:2 + nrest]
        (hsf_ref, hsb_ref, senc_ref, mask_ref,
         lwf_ref, lwb_ref, lwh_ref, linb_ref,
         out_ref, h_sc, c_sc) = refs[2 + nrest:]

        tblk = gx0_ref.shape[0]

        @pl.when(pl.program_id(0) == 0)
        def _():
            h_sc[...] = jnp.zeros_like(h_sc)
            c_sc[...] = jnp.zeros_like(c_sc)

        def cell(gates, c_prev):
            i = jax.nn.sigmoid(gates[:, 0 * H:1 * H])
            f = jax.nn.sigmoid(gates[:, 1 * H:2 * H])
            g = jnp.tanh(gates[:, 2 * H:3 * H])
            o = jax.nn.sigmoid(gates[:, 3 * H:4 * H])
            c = f * c_prev + i * g
            return o * jnp.tanh(c), c

        @pl.loop(0, tblk // unroll)
        def _(tt):
            for u in range(unroll):
                t = tt * unroll + u

                # ---- stacked LSTM cells (inter-layer dropout == identity) ----
                gates0 = gx0_ref[t].astype(jnp.float32) + jnp.dot(
                    h_sc[0].astype(_STREAM), whh0_ref[...],
                    preferred_element_type=jnp.float32)
                h, c = cell(gates0, c_sc[0])
                h_sc[0] = h
                c_sc[0] = c
                inp = h
                for l in range(1, n_layers):
                    w_ih_ref = layer_refs[3 * (l - 1)]
                    w_hh_ref = layer_refs[3 * (l - 1) + 1]
                    b_ref = layer_refs[3 * (l - 1) + 2]
                    gates = (
                        jnp.dot(inp.astype(_STREAM), w_ih_ref[...],
                                preferred_element_type=jnp.float32)
                        + jnp.dot(h_sc[l].astype(_STREAM), w_hh_ref[...],
                                  preferred_element_type=jnp.float32)
                        + b_ref[...])
                    h, c = cell(gates, c_sc[l])
                    h_sc[l] = h
                    c_sc[l] = c
                    inp = h
                h_t = inp                                          # (B, H) f32

                # ---- masked attention: VPU multiplies + lane reductions ----
                senc = senc_ref[...].astype(jnp.float32)           # (B, S, H)
                score = jnp.sum(h_t[:, None, :] * senc, axis=-1)   # (B, S)
                m = jnp.max(score, axis=-1, keepdims=True)
                p = jnp.exp(score - m)
                sp = jnp.sum(p, axis=-1, keepdims=True)
                # softmax(score)*mask + EPS == (p*mask + EPS*sp)/sp; the 1/sp
                # cancels in the renormalization -> one exact divide per step.
                masked = p * mask_ref[...] + EPSILON * sp
                attn = masked / jnp.sum(masked, axis=-1, keepdims=True)

                attn_b = attn[:, None, :]                          # (B, 1, S)
                wf = jnp.sum(attn_b * hsf_ref[...].astype(jnp.float32), axis=-1)
                wb = jnp.sum(attn_b * hsb_ref[...].astype(jnp.float32), axis=-1)

                # ctx = tanh(linear_out([weight_hs ; h_t]));  lin_w was split in
                # the wrapper, so nothing is re-sliced inside the loop.
                ctx = (jnp.dot(wf, lwf_ref[...], preferred_element_type=jnp.float32)
                       + jnp.dot(wb, lwb_ref[...], preferred_element_type=jnp.float32)
                       + jnp.dot(h_t, lwh_ref[...], preferred_element_type=jnp.float32)
                       + linb_ref[...])
                out_ref[t] = jnp.tanh(ctx).astype(_STREAM)

    return kernel


def decode_ctx(gx0, dec_params, hsf_bhs, hsb_bhs, senc_bsh, mask_bs,
               lin_w, lin_b):
    """gx0: (T_dec, B, 4H) layer-0 gates; enc states batch-major/lane-friendly."""
    T_dec, B, G = gx0.shape
    H = dec_params[0][1].shape[0]
    L = len(dec_params)
    Hs = hsf_bhs.shape[1]
    out_dim = lin_w.shape[1]

    tblk, Tp = _time_tile(T_dec)
    if Tp != T_dec:
        gx0 = jnp.pad(gx0, ((0, Tp - T_dec), (0, 0), (0, 0)))
    nb = Tp // tblk

    w_hh0 = dec_params[0][1].astype(_STREAM)
    rest, rest_specs = [], []
    for (w_ih, w_hh, b) in dec_params[1:]:
        rest += [w_ih.astype(_STREAM), w_hh.astype(_STREAM), b]
        rest_specs += [pl.BlockSpec(w_ih.shape, lambda i: (0, 0)),
                       pl.BlockSpec(w_hh.shape, lambda i: (0, 0)),
                       pl.BlockSpec(b.shape, lambda i: (0, 0))]

    lw_f = lin_w[:Hs, :]
    lw_b = lin_w[Hs:2 * Hs, :]
    lw_h = lin_w[2 * Hs:, :]

    need = (_nb((tblk, B, G), _STREAM) + _nb((tblk, B, out_dim), _STREAM)
            + _nb(w_hh0.shape, _STREAM)
            + sum(_nb(a.shape, a.dtype) for a in rest)
            + 2 * _nb(hsf_bhs.shape, _STREAM) + _nb(senc_bsh.shape, _STREAM)
            + _nb(mask_bs.shape, jnp.float32)
            + _nb(lin_w.shape, jnp.float32) + _nb(lin_b.shape, jnp.float32)
            + 2 * _nb((L, B, H), jnp.float32))

    kernel = _make_decoder_kernel(L, H, _UNROLL)
    out = pl.pallas_call(
        kernel,
        out_shape=jax.ShapeDtypeStruct((Tp, B, out_dim), _STREAM),
        grid_spec=pltpu.PrefetchScalarGridSpec(
            num_scalar_prefetch=0, grid=(nb,),
            in_specs=[pl.BlockSpec((tblk, B, G), lambda i: (i, 0, 0)),
                      pl.BlockSpec(w_hh0.shape, lambda i: (0, 0))]
                     + rest_specs
                     + [pl.BlockSpec(hsf_bhs.shape, lambda i: (0, 0, 0)),
                        pl.BlockSpec(hsb_bhs.shape, lambda i: (0, 0, 0)),
                        pl.BlockSpec(senc_bsh.shape, lambda i: (0, 0, 0)),
                        pl.BlockSpec(mask_bs.shape, lambda i: (0, 0)),
                        pl.BlockSpec(lw_f.shape, lambda i: (0, 0)),
                        pl.BlockSpec(lw_b.shape, lambda i: (0, 0)),
                        pl.BlockSpec(lw_h.shape, lambda i: (0, 0)),
                        pl.BlockSpec(lin_b.shape, lambda i: (0, 0))],
            out_specs=pl.BlockSpec((tblk, B, out_dim), lambda i: (i, 0, 0)),
            scratch_shapes=[pltpu.VMEM((L, B, H), jnp.float32),
                            pltpu.VMEM((L, B, H), jnp.float32)]),
        compiler_params=_mosaic(("arbitrary",), need),
    )(gx0, w_hh0, *rest, hsf_bhs, hsb_bhs, senc_bsh, mask_bs,
      lw_f, lw_b, lw_h, lin_b)
    return out[:T_dec] if Tp != T_dec else out


# ----------------------------------------------------------------------------
# Vocab projection + log_softmax, V-tiled:
#   kernel 1: logits blocks + online max/LSE accumulation (scratch) -> lse
#   kernel 2: logits - lse   (tiled subtract)
# ----------------------------------------------------------------------------
def _logits_lse_kernel(x_ref, w_ref, b_ref, logits_ref, lse_ref, m_sc, s_sc,
                       *, v_total, tv):
    j = pl.program_id(1)

    @pl.when(j == 0)
    def _():
        m_sc[...] = jnp.full(m_sc.shape, -jnp.inf, jnp.float32)
        s_sc[...] = jnp.zeros(s_sc.shape, jnp.float32)

    logits = (jnp.dot(x_ref[...].astype(jnp.float32), w_ref[...],
                      preferred_element_type=jnp.float32) + b_ref[...])
    logits_ref[...] = logits

    # Keep vocab columns past V (partial last block) out of the reduction.
    col = j * tv + lax.broadcasted_iota(jnp.int32, logits.shape, 1)
    lm = jnp.where(col < v_total, logits, -jnp.inf)
    m_new = jnp.maximum(m_sc[...], jnp.max(lm, axis=-1, keepdims=True))
    s_sc[...] = (s_sc[...] * jnp.exp(m_sc[...] - m_new)
                 + jnp.sum(jnp.exp(lm - m_new), axis=-1, keepdims=True))
    m_sc[...] = m_new

    @pl.when(j == pl.num_programs(1) - 1)
    def _():
        lse_ref[...] = m_sc[...] + jnp.log(s_sc[...])


def _sub_lse_kernel(logits_ref, lse_ref, o_ref):
    o_ref[...] = logits_ref[...] - lse_ref[...]


def vocab_logsoftmax(x, w, b):
    R, K = x.shape
    V = w.shape[1]
    tm = _row_tile(R, target=256)
    tv = _col_tile(V, target=512)
    nr = pl.cdiv(R, tm)
    nv = pl.cdiv(V, tv)

    need1 = (_nb((tm, K), x.dtype) + _nb((K, tv), jnp.float32)
             + _nb((1, tv), jnp.float32) + _nb((tm, tv), jnp.float32)
             + 2 * _nb((tm, 1), jnp.float32))
    logits, lse = pl.pallas_call(
        functools.partial(_logits_lse_kernel, v_total=V, tv=tv),
        out_shape=(jax.ShapeDtypeStruct((R, V), jnp.float32),
                   jax.ShapeDtypeStruct((R, 1), jnp.float32)),
        grid_spec=pltpu.PrefetchScalarGridSpec(
            num_scalar_prefetch=0, grid=(nr, nv),
            in_specs=[pl.BlockSpec((tm, K), lambda r, v: (r, 0)),
                      pl.BlockSpec((K, tv), lambda r, v: (0, v)),
                      pl.BlockSpec((1, tv), lambda r, v: (0, v))],
            out_specs=[pl.BlockSpec((tm, tv), lambda r, v: (r, v)),
                       pl.BlockSpec((tm, 1), lambda r, v: (r, 0))],
            scratch_shapes=[pltpu.VMEM((tm, 1), jnp.float32),
                            pltpu.VMEM((tm, 1), jnp.float32)]),
        compiler_params=_mosaic(("arbitrary", "arbitrary"), need1),
    )(x, w, b)

    need2 = 2 * _nb((tm, tv), jnp.float32) + _nb((tm, 1), jnp.float32)
    return pl.pallas_call(
        _sub_lse_kernel,
        out_shape=jax.ShapeDtypeStruct((R, V), jnp.float32),
        grid_spec=pltpu.PrefetchScalarGridSpec(
            num_scalar_prefetch=0, grid=(nr, nv),
            in_specs=[pl.BlockSpec((tm, tv), lambda r, v: (r, v)),
                      pl.BlockSpec((tm, 1), lambda r, v: (r, 0))],
            out_specs=pl.BlockSpec((tm, tv), lambda r, v: (r, v))),
        compiler_params=_mosaic(("parallel", "parallel"), need2),
    )(logits, lse)


# ----------------------------------------------------------------------------
# Full Transducer forward (JAX glue around the Pallas kernels).
# ----------------------------------------------------------------------------
def transducer_forward(params, src_batch, src_mask, trg_batch):
    # ---- encode ----  (dropout layers are eval-mode identity)
    emb = jnp.take(params["src_embed"], src_batch, axis=0)        # (S, B, E)
    S, B, E = emb.shape
    x_flat = emb.reshape(S * B, E)

    hs_f = hs_b = None
    for layer_idx, (fwd_p, bwd_p) in enumerate(params["enc"]):
        w_ih_f, w_hh_f, b_f = fwd_p
        w_ih_b, w_hh_b, b_b = bwd_p
        Hs = w_hh_f.shape[0]
        if layer_idx == 0:
            gxf, gxb = dual_proj(x_flat, w_ih_f, b_f, w_ih_b, b_b)
        else:
            gxf, gxb = dual_proj2(hs_f.reshape(S * B, Hs),
                                  hs_b.reshape(S * B, Hs),
                                  w_ih_f, b_f, w_ih_b, b_b)
        gxf = gxf.reshape(S, B, 4 * Hs)
        gxb = gxb.reshape(S, B, 4 * Hs)
        hs_f, hs_b = bilstm(gxf, gxb, w_hh_f, w_hh_b)             # (S,B,Hs) x2

    Hs = hs_f.shape[-1]
    senc = dense2(hs_f.reshape(S * B, Hs), hs_b.reshape(S * B, Hs),
                  params["scale_w"], params["scale_b"], out_dtype=_STREAM)
    Ht = senc.shape[-1]

    # Batch-major / lane-friendly layouts for the in-kernel attention:
    #   senc as (B, S, Ht)  -> score reduces over the lane axis,
    #   enc states as (B, Hs, S) -> weighted sum reduces over the lane axis.
    senc_bsh = senc.reshape(S, B, Ht).transpose(1, 0, 2)
    hsf_bhs = hs_f.transpose(1, 2, 0)
    hsb_bhs = hs_b.transpose(1, 2, 0)
    mask_bs = src_mask.T.astype(jnp.float32)                      # (B, S)

    # ---- decode ----
    trg_emb = jnp.take(params["trg_embed"], trg_batch, axis=0)    # (T, B, E)
    dec_in = trg_emb[:-1]                                          # T-1 steps
    T_dec = dec_in.shape[0]
    w_ih0, w_hh0, b0 = params["dec"][0]
    gx0 = dense(dec_in.reshape(T_dec * B, E), w_ih0, b0,
                out_dtype=_STREAM).reshape(T_dec, B, w_ih0.shape[1])

    ctx = decode_ctx(gx0, params["dec"], hsf_bhs, hsb_bhs, senc_bsh, mask_bs,
                     params["lin_w"], params["lin_b"])            # (T-1,B,out)
    out_dim = ctx.shape[-1]
    logprob = vocab_logsoftmax(ctx.reshape(T_dec * B, out_dim),
                               params["fin_w"], params["fin_b"])
    V = logprob.shape[-1]
    return logprob.reshape(T_dec, B, V)


# ----------------------------------------------------------------------------
# Pure-JAX reference (mirrors the PyTorch module, eval-mode) for validation.
# ----------------------------------------------------------------------------
def ref_forward(params, src_batch, src_mask, trg_batch):
    def lstm_layer(x, w_ih, w_hh, b, reverse):
        T, B, _ = x.shape
        H = w_hh.shape[0]
        h = jnp.zeros((B, H), jnp.float32)
        c = jnp.zeros((B, H), jnp.float32)
        order = range(T - 1, -1, -1) if reverse else range(T)
        outs = [None] * T
        for t in order:
            gates = x[t] @ w_ih + h @ w_hh + b
            i = jax.nn.sigmoid(gates[:, :H])
            f = jax.nn.sigmoid(gates[:, H:2 * H])
            g = jnp.tanh(gates[:, 2 * H:3 * H])
            o = jax.nn.sigmoid(gates[:, 3 * H:])
            c = f * c + i * g
            h = o * jnp.tanh(c)
            outs[t] = h
        return jnp.stack(outs)

    x = params["src_embed"][src_batch]
    for (wf, hf, bf), (wb, hb, bb) in params["enc"]:
        x = jnp.concatenate(
            [lstm_layer(x, wf, hf, bf, False), lstm_layer(x, wb, hb, bb, True)], -1)
    enc_hs = x
    senc = enc_hs @ params["scale_w"] + params["scale_b"]

    trg_emb = params["trg_embed"][trg_batch]
    L = len(params["dec"])
    H = params["dec"][0][1].shape[0]
    B = trg_batch.shape[1]
    hs = [jnp.zeros((B, H), jnp.float32) for _ in range(L)]
    cs = [jnp.zeros((B, H), jnp.float32) for _ in range(L)]
    outputs = []
    for t in range(trg_batch.shape[0] - 1):
        inp = trg_emb[t]
        for l, (w_ih, w_hh, b) in enumerate(params["dec"]):
            gates = inp @ w_ih + hs[l] @ w_hh + b
            i = jax.nn.sigmoid(gates[:, :H])
            f = jax.nn.sigmoid(gates[:, H:2 * H])
            g = jnp.tanh(gates[:, 2 * H:3 * H])
            o = jax.nn.sigmoid(gates[:, 3 * H:])
            cs[l] = f * cs[l] + i * g
            hs[l] = o * jnp.tanh(cs[l])
            inp = hs[l]
        h_t = inp
        score = jnp.einsum("sbd,bd->bs", senc, h_t)
        attn = jax.nn.softmax(score, axis=-1) * src_mask.T + EPSILON
        attn = attn / attn.sum(-1, keepdims=True)
        ctx = jnp.einsum("bs,sbd->bd", attn, enc_hs)
        ctx = jnp.concatenate([ctx, h_t], axis=1)
        ctx = jnp.tanh(ctx @ params["lin_w"] + params["lin_b"])
        logits = ctx @ params["fin_w"] + params["fin_b"]
        outputs.append(jax.nn.log_softmax(logits, axis=-1))
    return jnp.stack(outputs)


# ----------------------------------------------------------------------------
# Deterministic parameter init (shapes implied by Transducer.__init__).
# Weights stored transposed: (in_features, out_features).
# ----------------------------------------------------------------------------
def init_params(key, *, src_vocab, trg_vocab, embed_dim,
                src_hid, src_layers, trg_hid, trg_layers):
    keys = iter(jax.random.split(key, 64))

    def nrm(shape, scale=0.1):
        return scale * jax.random.normal(next(keys), shape, dtype=jnp.float32)

    src_embed = nrm((src_vocab, embed_dim)).at[PAD_IDX].set(0.0)
    trg_embed = nrm((trg_vocab, embed_dim)).at[PAD_IDX].set(0.0)

    enc = []
    in_dim = embed_dim
    for _ in range(src_layers):
        fwd = (nrm((in_dim, 4 * src_hid)), nrm((src_hid, 4 * src_hid)),
               nrm((1, 4 * src_hid)))
        bwd = (nrm((in_dim, 4 * src_hid)), nrm((src_hid, 4 * src_hid)),
               nrm((1, 4 * src_hid)))
        enc.append((fwd, bwd))
        in_dim = 2 * src_hid

    dec = []
    in_dim = embed_dim
    for _ in range(trg_layers):
        dec.append((nrm((in_dim, 4 * trg_hid)), nrm((trg_hid, 4 * trg_hid)),
                    nrm((1, 4 * trg_hid))))
        in_dim = trg_hid

    out_dim = trg_hid + 2 * src_hid
    return dict(
        src_embed=src_embed, trg_embed=trg_embed, enc=enc, dec=dec,
        scale_w=nrm((2 * src_hid, trg_hid)), scale_b=nrm((1, trg_hid)),
        lin_w=nrm((out_dim, out_dim)), lin_b=nrm((1, out_dim)),
        fin_w=nrm((out_dim, trg_vocab)), fin_b=nrm((1, trg_vocab)),
    )


if __name__ == "__main__":
    SRC_VOCAB, TRG_VOCAB = 20, 24
    EMBED = 32
    SRC_HID, SRC_LAYERS = 16, 2
    TRG_HID, TRG_LAYERS = 32, 2
    S_LEN, T_LEN, BATCH = 6, 5, 2

    key = jax.random.PRNGKey(0)
    kp, ks, kt = jax.random.split(key, 3)
    params = init_params(kp, src_vocab=SRC_VOCAB, trg_vocab=TRG_VOCAB,
                         embed_dim=EMBED, src_hid=SRC_HID, src_layers=SRC_LAYERS,
                         trg_hid=TRG_HID, trg_layers=TRG_LAYERS)

    src_batch = jax.random.randint(ks, (S_LEN, BATCH), 1, SRC_VOCAB)
    src_batch = src_batch.at[-1, 0].set(PAD_IDX)       # introduce one pad position
    src_mask = (src_batch != PAD_IDX).astype(jnp.float32)
    trg_batch = jax.random.randint(kt, (T_LEN, BATCH), 1, TRG_VOCAB)

    out = transducer_forward(params, src_batch, src_mask, trg_batch)
    out = jax.block_until_ready(out)

    assert out.shape == (T_LEN - 1, BATCH, TRG_VOCAB)
    assert bool(jnp.all(jnp.isfinite(out)))

    ref = ref_forward(params, src_batch, src_mask, trg_batch)
    max_err = float(jnp.max(jnp.abs(out - ref)))
    # 5e-2 tolerance: gate tensors / encoder states / ctx are streamed in
    # bfloat16 (f32 cell math, f32-accumulating MXU dots) vs the all-f32
    # reference; typical drift is a few 1e-3 on these shapes.
    assert max_err < 5e-2, f"mismatch vs reference: {max_err}"

    # TODO(synk): dropout layers are eval-mode identity; training-mode dropout
    # would need pltpu.prng_* inside the kernels.
    # TODO(synk): pack the tiny (B, H) state into a lane-dense layout when the
    # batch is intrinsically small (per-step stores are currently masked).
    print("KERNEL_OK")
</pallas_src>

<mosaic_0001>
module attributes {stable_mosaic.version = 11 : i64} {
  func.func @_dual_proj_kernel(%arg0: i32, %arg1: memref<12x32xf32, #tpu.memory_space<vmem>>, %arg2: memref<32x64xf32, #tpu.memory_space<vmem>>, %arg3: memref<1x64xf32, #tpu.memory_space<vmem>>, %arg4: memref<32x64xf32, #tpu.memory_space<vmem>>, %arg5: memref<1x64xf32, #tpu.memory_space<vmem>>, %arg6: memref<12x64xbf16, #tpu.memory_space<vmem>>, %arg7: memref<12x64xbf16, #tpu.memory_space<vmem>>) attributes {dimension_semantics = [#tpu.dimension_semantics<parallel>], iteration_bounds = array<i64: 1>, scalar_prefetch = 0 : i64, scratch_operands = 0 : i64, tpu.core_type = #tpu.core_type<tc>, window_params = [{transform_indices = @transform_0, window_bounds = array<i64: 12, 32>}, {pipeline_mode = #tpu.pipeline_mode<synchronous>, transform_indices = @transform_1, window_bounds = array<i64: 32, 64>}, {pipeline_mode = #tpu.pipeline_mode<synchronous>, transform_indices = @transform_2, window_bounds = array<i64: 1, 64>}, {pipeline_mode = #tpu.pipeline_mode<synchronous>, transform_indices = @transform_3, window_bounds = array<i64: 32, 64>}, {pipeline_mode = #tpu.pipeline_mode<synchronous>, transform_indices = @transform_4, window_bounds = array<i64: 1, 64>}, {transform_indices = @transform_5, window_bounds = array<i64: 12, 64>}, {transform_indices = @transform_6, window_bounds = array<i64: 12, 64>}]} {
    %c0 = arith.constant 0 : index
    %c0_0 = arith.constant 0 : index
    %0 = vector.load %arg1[%c0, %c0_0] : memref<12x32xf32, #tpu.memory_space<vmem>>, vector<12x32xf32>
    %c0_1 = arith.constant 0 : index
    %c0_2 = arith.constant 0 : index
    %1 = vector.load %arg2[%c0_1, %c0_2] : memref<32x64xf32, #tpu.memory_space<vmem>>, vector<32x64xf32>
    %cst = arith.constant dense<0.000000e+00> : vector<12x64xf32>
    %2 = tpu.matmul %0, %1, %cst {dimension_numbers = #tpu.dot_dimension_numbers<[1], [0], [0], [1], [0, 0, 1, 1], [], []>} : vector<12x32xf32>, vector<32x64xf32>, vector<12x64xf32> -> vector<12x64xf32>
    %c0_3 = arith.constant 0 : index
    %c0_4 = arith.constant 0 : index
    %3 = vector.load %arg3[%c0_3, %c0_4] : memref<1x64xf32, #tpu.memory_space<vmem>>, vector<1x64xf32>
    %4 = vector.broadcast %3 : vector<1x64xf32> to vector<12x64xf32>
    %5 = arith.addf %2, %4 : vector<12x64xf32>
    %6 = arith.truncf %5 : vector<12x64xf32> to vector<12x64xbf16>
    %c0_5 = arith.constant 0 : index
    %c0_6 = arith.constant 0 : index
    %7 = vector.load %arg6[%c0_5, %c0_6] : memref<12x64xbf16, #tpu.memory_space<vmem>>, vector<12x64xbf16>
    tpu.vector_store %arg6[%c0_5, %c0_6], %6 {strides = array<i32>} : memref<12x64xbf16, #tpu.memory_space<vmem>>, vector<12x64xbf16>,
    %c0_7 = arith.constant 0 : index
    %c0_8 = arith.constant 0 : index
    %8 = vector.load %arg4[%c0_7, %c0_8] : memref<32x64xf32, #tpu.memory_space<vmem>>, vector<32x64xf32>
    %cst_9 = arith.constant dense<0.000000e+00> : vector<12x64xf32>
    %9 = tpu.matmul %0, %8, %cst_9 {dimension_numbers = #tpu.dot_dimension_numbers<[1], [0], [0], [1], [0, 0, 1, 1], [], []>} : vector<12x32xf32>, vector<32x64xf32>, vector<12x64xf32> -> vector<12x64xf32>
    %c0_10 = arith.constant 0 : index
    %c0_11 = arith.constant 0 : index
    %10 = vector.load %arg5[%c0_10, %c0_11] : memref<1x64xf32, #tpu.memory_space<vmem>>, vector<1x64xf32>
    %11 = vector.broadcast %10 : vector<1x64xf32> to vector<12x64xf32>
    %12 = arith.addf %9, %11 : vector<12x64xf32>
    %13 = arith.truncf %12 : vector<12x64xf32> to vector<12x64xbf16>
    %c0_12 = arith.constant 0 : index
    %c0_13 = arith.constant 0 : index
    %14 = vector.load %arg7[%c0_12, %c0_13] : memref<12x64xbf16, #tpu.memory_space<vmem>>, vector<12x64xbf16>
    tpu.vector_store %arg7[%c0_12, %c0_13], %13 {strides = array<i32>} : memref<12x64xbf16, #tpu.memory_space<vmem>>, vector<12x64xbf16>,
    return
  }
  func.func @transform_0(%arg0: i32) -> (i32, i32) {
    %c0_i32 = arith.constant 0 : i32
    %c0_i32_0 = arith.constant 0 : i32
    return %arg0, %c0_i32 : i32, i32
  }
  func.func @transform_1(%arg0: i32) -> (i32, i32) {
    %c0_i32 = arith.constant 0 : i32
    %c0_i32_0 = arith.constant 0 : i32
    %c0_i32_1 = arith.constant 0 : i32
    return %c0_i32, %c0_i32_0 : i32, i32
  }
  func.func @transform_2(%arg0: i32) -> (i32, i32) {
    %c0_i32 = arith.constant 0 : i32
    %c0_i32_0 = arith.constant 0 : i32
    %c0_i32_1 = arith.constant 0 : i32
    return %c0_i32, %c0_i32_0 : i32, i32
  }
  func.func @transform_3(%arg0: i32) -> (i32, i32) {
    %c0_i32 = arith.constant 0 : i32
    %c0_i32_0 = arith.constant 0 : i32
    %c0_i32_1 = arith.constant 0 : i32
    return %c0_i32, %c0_i32_0 : i32, i32
  }
  func.func @transform_4(%arg0: i32) -> (i32, i32) {
    %c0_i32 = arith.constant 0 : i32
    %c0_i32_0 = arith.constant 0 : i32
    %c0_i32_1 = arith.constant 0 : i32
    return %c0_i32, %c0_i32_0 : i32, i32
  }
  func.func @transform_5(%arg0: i32) -> (i32, i32) {
    %c0_i32 = arith.constant 0 : i32
    %c0_i32_0 = arith.constant 0 : i32
    return %arg0, %c0_i32 : i32, i32
  }
  func.func @transform_6(%arg0: i32) -> (i32, i32) {
    %c0_i32 = arith.constant 0 : i32
    %c0_i32_0 = arith.constant 0 : i32
    return %arg0, %c0_i32 : i32, i32
  }
}

</mosaic_0001>

<llo_original>
// kernel: tpu_custom_call.1
$region0: #{tpu_custom_call.1}
  #allocation0 [shape = 'u32[]', space=smem, size = 0x4, offset = 0x4, fixed_abs, tag = 'smem constant byte address 0x4 - core index']
  #allocation1 [shape = 'u32[72,128]{1,0:T(1,128)}', space=vmem, size = 0x9000, scoped, tag = 'internal scratch']
  %s0 = inlined_call_operand.hbm [shape: f32[12,32], index: 0, kind: input, shape index: {}]
  %s1 = inlined_call_operand.hbm [shape: f32[32,64], index: 1, kind: input, shape index: {}]
  %s2 = inlined_call_operand.vmem [shape: f32[1,64], index: 2, kind: input, shape index: {}]
  %s3 = inlined_call_operand.hbm [shape: f32[32,64], index: 3, kind: input, shape index: {}]
  %s4 = inlined_call_operand.vmem [shape: f32[1,64], index: 4, kind: input, shape index: {}]
  %s5 = inlined_call_operand.hbm [shape: bf16[12,64], index: 5, kind: output, shape index: {0}]
  %s6 = inlined_call_operand.hbm [shape: bf16[12,64], index: 6, kind: output, shape index: {1}]
  %7 = xla_tuple %s5, %s6
  %s8 = sld [smem:[#allocation0]]
  $region50: #{tpu_custom_call.1} parent=0
    _
  %s10 = ssub.s32 1, %s8
  %s11 = scalar_select 0, %s10, %s8
  $region1: #{tpu_custom_call.1} parent=0
    #allocation2 [shape = 'u8[8192]{0}', space=vmem, size = 0x2000, scoped, tag = 'input window, operand 0, single buffered']
    #allocation3 [shape = 's32[1]{0}', space=sflag, size = 0x4, scoped, tag = 'scoped memory for tpu_custom_call.1']
    #allocation4 [shape = 's32[1]{0}', space=sflag, size = 0x4, scoped, tag = 'scoped memory for tpu_custom_call.1']
    #allocation5 [shape = 'u8[16384]{0}', space=vmem, size = 0x4000, scoped, tag = 'input window, operand 1, single buffered']
    #allocation6 [shape = 's32[1]{0}', space=sflag, size = 0x4, scoped, tag = 'scoped memory for tpu_custom_call.1']
    #allocation7 [shape = 'u8[16384]{0}', space=vmem, size = 0x4000, scoped, tag = 'input window, operand 3, single buffered']
    #allocation8 [shape = 'u8[4096]{0}', space=vmem, size = 0x1000, scoped, tag = 'output window, operand 0, single buffered']
    #allocation9 [shape = 'u8[4096]{0}', space=vmem, size = 0x1000, scoped, tag = 'output window, operand 1, single buffered']
    #allocation10 [shape = 's32[1]{0}', space=sflag, size = 0x4, scoped, tag = 'scoped memory for tpu_custom_call.1']
    %12 = vsyncpa [#allocation3], 0
    %13 = vsyncpa [#allocation6], 0
    %14 = vsyncpa [#allocation4], 0
    %15 = vsyncpa [#allocation10], 0
    // Predicated region
    $region2: #{tpu_custom_call.1} parent=1 // pred_check
      _
    $region3: #{tpu_custom_call.1} parent=1 // pred_check_branch
      %17 = sbr.rel (0) target = $region5
    $region4: #{tpu_custom_call.1} parent=1 // pred_region
      %19 = vsyncadd [#allocation3], 0
      %s20 = sshll.u32 %s0, 4
      %s21 = int_to_ptr.hbm [resolvable:$true] %s20
      %s22 = sshll.u32 [#allocation2], 4
      %s23 = int_to_ptr.vmem [resolvable:$true] %s22
      %28 = dma.hbm_to_vmem [thread:$0]  %s21, 256, %s23, [#allocation3], 128, 128, 8
    $region5: #{tpu_custom_call.1} parent=1 // pred_fallthru
      _
    // Predicated region
    $region6: #{tpu_custom_call.1} parent=1 // pred_check
      _
    $region7: #{tpu_custom_call.1} parent=1 // pred_check_branch
      %30 = sbr.rel (0) target = $region9
    $region8: #{tpu_custom_call.1} parent=1 // pred_region
      %32 = vsyncadd [#allocation6], 0
      %s33 = sshll.u32 %s1, 4
      %s34 = int_to_ptr.hbm [resolvable:$true] %s33
      %s35 = sshll.u32 [#allocation5], 4
      %s36 = int_to_ptr.vmem [resolvable:$true] %s35
      %41 = dma.hbm_to_vmem [thread:$0]  %s34, 512, %s36, [#allocation6], 128, 128, 8
    $region9: #{tpu_custom_call.1} parent=1 // pred_fallthru
      _
    // Predicated region
    $region10: #{tpu_custom_call.1} parent=1 // pred_check
      _
    $region11: #{tpu_custom_call.1} parent=1 // pred_check_branch
      %43 = sbr.rel (0) target = $region13
    $region12: #{tpu_custom_call.1} parent=1 // pred_region
      _
    $region13: #{tpu_custom_call.1} parent=1 // pred_fallthru
      _
    // Predicated region
    $region14: #{tpu_custom_call.1} parent=1 // pred_check
      _
    $region15: #{tpu_custom_call.1} parent=1 // pred_check_branch
      %45 = sbr.rel (0) target = $region17
    $region16: #{tpu_custom_call.1} parent=1 // pred_region
      %47 = vsyncadd [#allocation6], 0
      %s48 = sshll.u32 %s3, 4
      %s49 = int_to_ptr.hbm [resolvable:$true] %s48
      %s50 = sshll.u32 [#allocation7], 4
      %s51 = int_to_ptr.vmem [resolvable:$true] %s50
      %56 = dma.hbm_to_vmem [thread:$0]  %s49, 512, %s51, [#allocation6], 128, 128, 8
    $region17: #{tpu_custom_call.1} parent=1 // pred_fallthru
      _
    // Predicated region
    $region18: #{tpu_custom_call.1} parent=1 // pred_check
      _
    $region19: #{tpu_custom_call.1} parent=1 // pred_check_branch
      %58 = sbr.rel (0) target = $region21
    $region20: #{tpu_custom_call.1} parent=1 // pred_region
      _
    $region21: #{tpu_custom_call.1} parent=1 // pred_fallthru
      _
    // Predicated region
    $region22: #{tpu_custom_call.1} parent=1 // pred_check
      _
    $region23: #{tpu_custom_call.1} parent=1 // pred_check_branch
      %60 = sbr.rel (0) target = $region25
    $region24: #{tpu_custom_call.1} parent=1 // pred_region
      %62 = dma.done [#allocation3], 256
    $region25: #{tpu_custom_call.1} parent=1 // pred_fallthru
      _
    // Predicated region
    $region26: #{tpu_custom_call.1} parent=1 // pred_check
      _
    $region27: #{tpu_custom_call.1} parent=1 // pred_check_branch
      %64 = sbr.rel (0) target = $region29
    $region28: #{tpu_custom_call.1} parent=1 // pred_region
      %66 = dma.done [#allocation6], 512
    $region29: #{tpu_custom_call.1} parent=1 // pred_fallthru
      _
    // Predicated region
    $region30: #{tpu_custom_call.1} parent=1 // pred_check
      _
    $region31: #{tpu_custom_call.1} parent=1 // pred_check_branch
      %68 = sbr.rel (0) target = $region33
    $region32: #{tpu_custom_call.1} parent=1 // pred_region
      %70 = dma.done [#allocation6], 512
    $region33: #{tpu_custom_call.1} parent=1 // pred_fallthru
      _
    %v71 = vld [vmem:[#allocation2] sm:$0xff]
    %v72 = vld [vmem:[#allocation2 + $0x8] sm:$0xf]
    %v73 = vld [vmem:[#allocation5] sm:$0xff]
    %v74 = vld [vmem:[#allocation5 + $0x8] sm:$0xff]
    %v75 = vld [vmem:[#allocation5 + $0x10] sm:$0xff]
    %v76 = vld [vmem:[#allocation5 + $0x18] sm:$0xff]
    %v77 = vld [vmem:[%s2] sm:$0x1]
    %v79 = vperm.slane %v77, 0
    %vm81 = vcmask 261120
    %v83 = vsel %vm81, %v71, 0
    %v86 = vsel %vm81, %v72, 0
    %88 = vmatpush.msra.mxu0 0.0
    %89 = vmatpush.msra.mxu0 0.0
    %90 = vmatpush.msra.mxu0 0.0
    %91 = vmatpush.msra.mxu0 0.0
    %92 = vmatpush.msra.mxu0 0.0
    %93 = vmatpush.msra.mxu0 0.0
    %94 = vmatpush.msra.mxu0 0.0
    %95 = vmatpush.msra.mxu0 0.0
    %96 = vmatpush.msra.mxu0 0.0
    %97 = vmatpush.msra.mxu0 0.0
    %98 = vmatpush.msra.mxu0 0.0
    %99 = vmatpush.msra.mxu0 0.0
    %100 = vmatpush.msra.mxu0 %v76
    %101 = vmatpush.msra.mxu0 %v75
    %102 = vmatpush.msra.mxu0 %v74
    %103 = vmatpush.msra.mxu0 %v73
    %104 = vmatmul.f32.gmra.mxu0 %v83
    %v105 = vpop.f32.mrf.mxu0
    %v106 = vadd.f32 %v79, %v105
    %107 = vmatmul.f32.gmra.mxu0 %v86
    %v108 = vpop.f32.mrf.mxu0
    %v109 = vadd.f32 %v79, %v108
    %110 = vdwg.mxu0
    %v111 = vpack.c.bf16 %v106, %v106
    %v112 = vpack.c.bf16 %v109, %v109
    %vm113 = vcmask 519168
    %114 = vst.msk [vmem:[#allocation8] sm:$0xf] %vm113, %v111
    %vm115 = vcmask 517120
    %116 = vst.msk [vmem:[#allocation8 + $0x4] sm:$0x3] %vm115, %v112
    %v117 = vld [vmem:[#allocation7] sm:$0xff]
    %v118 = vld [vmem:[#allocation7 + $0x8] sm:$0xff]
    %v119 = vld [vmem:[#allocation7 + $0x10] sm:$0xff]
    %v120 = vld [vmem:[#allocation7 + $0x18] sm:$0xff]
    %v121 = vld [vmem:[%s4] sm:$0x1]
    %v123 = vperm.slane %v121, 0
    %125 = vmatpush.msra.mxu0 0.0
    %126 = vmatpush.msra.mxu0 0.0
    %127 = vmatpush.msra.mxu0 0.0
    %128 = vmatpush.msra.mxu0 0.0
    %129 = vmatpush.msra.mxu0 0.0
    %130 = vmatpush.msra.mxu0 0.0
    %131 = vmatpush.msra.mxu0 0.0
    %132 = vmatpush.msra.mxu0 0.0
    %133 = vmatpush.msra.mxu0 0.0
    %134 = vmatpush.msra.mxu0 0.0
    %135 = vmatpush.msra.mxu0 0.0
    %136 = vmatpush.msra.mxu0 0.0
    %137 = vmatpush.msra.mxu0 %v120
    %138 = vmatpush.msra.mxu0 %v119
    %139 = vmatpush.msra.mxu0 %v118
    %140 = vmatpush.msra.mxu0 %v117
    %141 = vmatmul.f32.gmra.mxu0 %v83
    %v142 = vpop.f32.mrf.mxu0
    %v143 = vadd.f32 %v123, %v142
    %144 = vmatmul.f32.gmra.mxu0 %v86
    %v145 = vpop.f32.mrf.mxu0
    %v146 = vadd.f32 %v123, %v145
    %147 = vdwg.mxu0
    %v148 = vpack.c.bf16 %v143, %v143
    %v149 = vpack.c.bf16 %v146, %v146
    %150 = vst.msk [vmem:[#allocation9] sm:$0xf] %vm113, %v148
    %151 = vst.msk [vmem:[#allocation9 + $0x4] sm:$0x3] %vm115, %v149
    // Predicated region
    $region34: #{tpu_custom_call.1} parent=1 // pred_check
      _
    $region35: #{tpu_custom_call.1} parent=1 // pred_check_branch
      %153 = sbr.rel (0) target = $region37
    $region36: #{tpu_custom_call.1} parent=1 // pred_region
      %155 = vsyncadd [#allocation4], 0
      %s156 = sshll.u32 [#allocation8], 4
      %s157 = int_to_ptr.vmem [resolvable:$true] %s156
      %s158 = sshll.u32 %s5, 4
      %s159 = int_to_ptr.hbm [resolvable:$true] %s158
      %164 = dma.vmem_to_hbm [thread:$0]  %s157, 128, %s159, [#allocation4], 64, 64, 4
    $region37: #{tpu_custom_call.1} parent=1 // pred_fallthru
      _
    // Predicated region
    $region38: #{tpu_custom_call.1} parent=1 // pred_check
      _
    $region39: #{tpu_custom_call.1} parent=1 // pred_check_branch
      %166 = sbr.rel (0) target = $region41
    $region40: #{tpu_custom_call.1} parent=1 // pred_region
      %168 = vsyncadd [#allocation10], 0
      %s169 = sshll.u32 [#allocation9], 4
      %s170 = int_to_ptr.vmem [resolvable:$true] %s169
      %s171 = sshll.u32 %s6, 4
      %s172 = int_to_ptr.hbm [resolvable:$true] %s171
      %177 = dma.vmem_to_hbm [thread:$0]  %s170, 128, %s172, [#allocation10], 64, 64, 4
    $region41: #{tpu_custom_call.1} parent=1 // pred_fallthru
      _
    // Predicated region
    $region42: #{tpu_custom_call.1} parent=1 // pred_check
      _
    $region43: #{tpu_custom_call.1} parent=1 // pred_check_branch
      %179 = sbr.rel (0) target = $region45
    $region44: #{tpu_custom_call.1} parent=1 // pred_region
      %181 = dma.done [#allocation4], 128
    $region45: #{tpu_custom_call.1} parent=1 // pred_fallthru
      _
    // Predicated region
    $region46: #{tpu_custom_call.1} parent=1 // pred_check
      _
    $region47: #{tpu_custom_call.1} parent=1 // pred_check_branch
      %183 = sbr.rel (0) target = $region49
    $region48: #{tpu_custom_call.1} parent=1 // pred_region
      %185 = dma.done [#allocation10], 128
    $region49: #{tpu_custom_call.1} parent=1 // pred_fallthru
      _
    %186 = vsyncpa [#allocation3], 1
    %187 = vsyncpa [#allocation6], 1
    %188 = vsyncpa [#allocation4], 1
    %189 = vsyncpa [#allocation10], 1

</llo_original>
